<compile_context>
chip_gen: v7x
topology: tpu7x:2x2x1
jax: 0.10.0
libtpu: 0.0.40
codegen_flags: <defaults>
</compile_context>

<pallas_src>
import functools

import jax
import jax.numpy as jnp
from jax import lax
from jax.experimental import pallas as pl
from jax.experimental.pallas import tpu as pltpu


def _round_up(x, m):
    return ((x + m - 1) // m) * m


def _focal_loss_kernel(logits_ref, xt_ref, partial_ref, *, alpha, gamma, n_valid):
    i = pl.program_id(0)

    x = logits_ref[...].astype(jnp.float32)          # (tn, C)
    x_t = xt_ref[...]                                # (tn, 1) f32: logit of target class
    tn = x.shape[0]

    # numerically-stable log-sum-exp per row
    m = jnp.max(x, axis=-1, keepdims=True)                              # (tn, 1)
    lse = m + jnp.log(jnp.sum(jnp.exp(x - m), axis=-1, keepdims=True))  # (tn, 1)

    # clamp: mathematically ce >= 0, but fp rounding can make it slightly
    # negative (then pt > 1 and (1 - pt)**gamma could NaN for float gamma)
    ce = jnp.maximum(lse - x_t, 0.0)                                    # (tn, 1)
    pt = jnp.exp(-ce)
    w = 1.0 - pt                                                        # >= 0

    # focal weight: integer gamma -> repeated multiplication on the VPU
    # (keeps the EUP free for the softmax exp); otherwise guarded pow.
    g = float(gamma)
    if g == float(int(g)) and 0 <= int(g) <= 16:
        wg = jnp.ones_like(w)
        base, e = w, int(g)
        while e:
            if e & 1:
                wg = wg * base
            base = base * base
            e >>= 1
    else:
        wg = jnp.power(jnp.maximum(w, 0.0), g)

    fl = alpha * wg * ce                                                # (tn, 1)

    # Mask rows past the true N (ragged edge block). This is a select, so
    # NaN/Inf computed from undefined padded rows cannot propagate.
    # (int32 index math: fine for N < 2^31.)
    rows = i * tn + lax.broadcasted_iota(jnp.int32, (tn, 1), 0)
    fl = jnp.where(rows < n_valid, fl, 0.0)

    # per-tile partial sum, written to a lane-dense (8,128)-aligned block so
    # the grid axis can be "parallel" (no carried accumulator).
    partial_ref[...] = jnp.broadcast_to(
        jnp.sum(fl), partial_ref.shape).astype(jnp.float32)


def focal_loss(logits, targets, *, alpha=1.0, gamma=2.0, tn=None):
    """logits: (N, C) f32/bf16, targets: (N,) int. Returns scalar mean focal loss."""
    N, C = logits.shape
    itemsize = jnp.dtype(logits.dtype).itemsize
    gran = 16 if itemsize == 2 else 8            # sublane packing granularity

    # Per-row VMEM cost, including 128-lane padding of both pipelined operands:
    # the (tn, C) logits block and the (tn, 1) f32 x_t block.
    row_bytes = _round_up(C, 128) * itemsize + 128 * 4

    if tn is None:
        # 2 pipeline buffers x (logits + x_t) <= ~12 MiB: inside the v5e 16-MiB
        # scoped-VMEM default with headroom; well inside v6e/v7x budgets.
        vmem_budget = 12 * 1024 * 1024
        tn_fit = max(gran, (vmem_budget // (2 * row_bytes)) // gran * gran)
        # Keep >= ~8 tiles so the "parallel" grid axis can feed both v7x TCs.
        tn_par = max(gran, _round_up(pl.cdiv(N, 8), gran))
        tn = min(tn_fit, tn_par)
    else:
        tn = max(gran, _round_up(int(tn), gran))
    tn = min(tn, _round_up(N, gran))
    tn = max(tn, gran)

    num_tiles = pl.cdiv(N, tn)

    # Hoist the target-class logit gather out of the kernel: N elements, ~4N B.
    targets2d = targets.reshape(N, 1).astype(jnp.int32)
    x_t = jnp.take_along_axis(logits, targets2d, axis=-1).astype(jnp.float32)  # (N, 1)

    kernel = functools.partial(
        _focal_loss_kernel, alpha=float(alpha), gamma=float(gamma), n_valid=N)

    cost = pl.CostEstimate(
        flops=6 * N * C + 10 * N,
        transcendentals=N * C + 2 * N,
        bytes_accessed=N * C * itemsize + N * 4 + num_tiles * 8 * 128 * 4,
    )

    partials = pl.pallas_call(
        kernel,
        out_shape=jax.ShapeDtypeStruct((num_tiles, 8, 128), jnp.float32),
        grid_spec=pltpu.PrefetchScalarGridSpec(
            num_scalar_prefetch=0,
            grid=(num_tiles,),
            in_specs=[
                pl.BlockSpec((tn, C), lambda i: (i, 0)),
                pl.BlockSpec((tn, 1), lambda i: (i, 0)),
            ],
            out_specs=pl.BlockSpec((1, 8, 128), lambda i: (i, 0, 0)),
        ),
        compiler_params=pltpu.CompilerParams(
            dimension_semantics=("parallel",)),   # independent tiles -> 2 TCs on v7x
        cost_estimate=cost,
    )(logits, x_t)

    # tiny host-side reduce over per-tile partials, then mean over true N
    return jnp.sum(partials[:, 0, 0]) / jnp.float32(N)


def focal_loss_ref(logits, targets, alpha=1.0, gamma=2.0):
    """Pure-JAX reference matching torch CrossEntropyLoss(reduction='none') + focal."""
    logp = jax.nn.log_softmax(logits.astype(jnp.float32), axis=-1)
    ce = -jnp.take_along_axis(logp, targets[:, None].astype(jnp.int32), axis=-1)[:, 0]
    pt = jnp.exp(-ce)
    return jnp.mean(alpha * (1.0 - pt) ** gamma * ce)


if __name__ == "__main__":
    key = jax.random.PRNGKey(0)
    k1, k2 = jax.random.split(key)
    N, C = 16, 8                               # small shapes: 16 samples, 8 classes
    logits = jax.random.normal(k1, (N, C), dtype=jnp.float32)
    targets = jax.random.randint(k2, (N,), 0, C, dtype=jnp.int32)

    # f32 path (auto tile)
    out = jax.block_until_ready(focal_loss(logits, targets, alpha=1.0, gamma=2.0))
    ref = jax.block_until_ready(focal_loss_ref(logits, targets, alpha=1.0, gamma=2.0))
    assert jnp.allclose(out, ref, rtol=1e-5, atol=1e-6), (out, ref)

    # ragged N (exercises cdiv grid + in-kernel row mask, no wrapper padding)
    out_r = jax.block_until_ready(
        focal_loss(logits[:13], targets[:13], alpha=1.0, gamma=2.0, tn=8))
    ref_r = jax.block_until_ready(
        focal_loss_ref(logits[:13], targets[:13], alpha=1.0, gamma=2.0))
    assert jnp.allclose(out_r, ref_r, rtol=1e-5, atol=1e-6), (out_r, ref_r)

    # bf16 logits (halved HBM traffic path; kernel upcasts internally)
    out_bf = jax.block_until_ready(
        focal_loss(logits.astype(jnp.bfloat16), targets, alpha=1.0, gamma=2.0))
    ref_bf = jax.block_until_ready(
        focal_loss_ref(logits.astype(jnp.bfloat16), targets, alpha=1.0, gamma=2.0))
    assert jnp.allclose(out_bf, ref_bf, rtol=2e-2, atol=2e-3), (out_bf, ref_bf)

    print("KERNEL_OK")
</pallas_src>

<mosaic_0001>
module attributes {stable_mosaic.version = 11 : i64} {
  func.func @_focal_loss_kernel(%arg0: i32, %arg1: memref<8x8xf32, #tpu.memory_space<vmem>>, %arg2: memref<8x1xf32, #tpu.memory_space<vmem>>, %arg3: memref<1x8x128xf32, #tpu.memory_space<vmem>>) attributes {dimension_semantics = [#tpu.dimension_semantics<parallel>], iteration_bounds = array<i64: 2>, scalar_prefetch = 0 : i64, scratch_operands = 0 : i64, tpu.core_type = #tpu.core_type<tc>, window_params = [{transform_indices = @transform_0, window_bounds = array<i64: 8, 8>}, {transform_indices = @transform_1, window_bounds = array<i64: 8, 1>}, {transform_indices = @transform_2, window_bounds = array<i64: 1, 8, 128>}]} {
    %c0 = arith.constant 0 : index
    %c0_0 = arith.constant 0 : index
    %0 = vector.load %arg1[%c0, %c0_0] : memref<8x8xf32, #tpu.memory_space<vmem>>, vector<8x8xf32>
    %c0_1 = arith.constant 0 : index
    %c0_2 = arith.constant 0 : index
    %1 = vector.load %arg2[%c0_1, %c0_2] : memref<8x1xf32, #tpu.memory_space<vmem>>, vector<8x1xf32>
    %cst = arith.constant dense<0xFF800000> : vector<8xf32>
    %2 = vector.multi_reduction <maximumf>, %0, %cst [1] : vector<8x8xf32> to vector<8xf32>
    %3 = vector.shape_cast %2 : vector<8xf32> to vector<8x1xf32>
    %4 = vector.broadcast %3 : vector<8x1xf32> to vector<8x8xf32>
    %5 = arith.subf %0, %4 : vector<8x8xf32>
    %6 = math.exp %5 : vector<8x8xf32>
    %cst_3 = arith.constant dense<0.000000e+00> : vector<8xf32>
    %7 = vector.multi_reduction <add>, %6, %cst_3 [1] : vector<8x8xf32> to vector<8xf32>
    %8 = vector.shape_cast %7 : vector<8xf32> to vector<8x1xf32>
    %9 = math.log %8 : vector<8x1xf32>
    %10 = arith.addf %3, %9 : vector<8x1xf32>
    %11 = arith.subf %10, %1 : vector<8x1xf32>
    %cst_4 = arith.constant 0.000000e+00 : f32
    %12 = vector.broadcast %cst_4 : f32 to vector<8x1xf32>
    %13 = arith.maximumf %11, %12 : vector<8x1xf32>
    %cst_5 = arith.constant 0.000000e+00 : f32
    %14 = vector.broadcast %cst_5 : f32 to vector<8x1xf32>
    %15 = arith.subf %14, %13 : vector<8x1xf32>
    %16 = math.exp %15 : vector<8x1xf32>
    %cst_6 = arith.constant 1.000000e+00 : f32
    %17 = vector.broadcast %cst_6 : f32 to vector<8x1xf32>
    %18 = arith.subf %17, %16 : vector<8x1xf32>
    %cst_7 = arith.constant 1.000000e+00 : f32
    %19 = vector.broadcast %cst_7 : f32 to vector<8x1xf32>
    %20 = arith.mulf %18, %18 : vector<8x1xf32>
    %21 = arith.mulf %19, %20 : vector<8x1xf32>
    %cst_8 = arith.constant 1.000000e+00 : f32
    %22 = vector.broadcast %cst_8 : f32 to vector<8x1xf32>
    %23 = arith.mulf %22, %21 : vector<8x1xf32>
    %24 = arith.mulf %23, %13 : vector<8x1xf32>
    %c8_i32 = arith.constant 8 : i32
    %25 = arith.muli %arg0, %c8_i32 : i32
    %26 = tpu.iota {dimensions = array<i32: 0>} : vector<8x1xi32>
    %27 = vector.broadcast %25 : i32 to vector<8x1xi32>
    %28 = arith.addi %27, %26 : vector<8x1xi32>
    %c16_i32 = arith.constant 16 : i32
    %29 = vector.broadcast %c16_i32 : i32 to vector<8x1xi32>
    %30 = arith.cmpi slt, %28, %29 : vector<8x1xi32>
    %cst_9 = arith.constant 0.000000e+00 : f32
    %31 = vector.broadcast %cst_9 : f32 to vector<8x1xf32>
    %32 = arith.select %30, %24, %31 : vector<8x1xi1>, vector<8x1xf32>
    %33 = vector.shape_cast %32 : vector<8x1xf32> to vector<1x8x1xf32>
    %cst_10 = arith.constant dense<0.000000e+00> : vector<1xf32>
    %34 = vector.multi_reduction <add>, %33, %cst_10 [1, 2] : vector<1x8x1xf32> to vector<1xf32>
    %35 = vector.shape_cast %34 : vector<1xf32> to vector<1x1x1xf32>
    %36 = vector.extract %35[0, 0, 0] : f32 from vector<1x1x1xf32>
    %37 = vector.broadcast %36 : f32 to vector<1x8x128xf32>
    %c0_11 = arith.constant 0 : index
    %c0_12 = arith.constant 0 : index
    %c0_13 = arith.constant 0 : index
    %38 = vector.load %arg3[%c0_11, %c0_12, %c0_13] : memref<1x8x128xf32, #tpu.memory_space<vmem>>, vector<1x8x128xf32>
    tpu.vector_store %arg3[%c0_11, %c0_12, %c0_13], %37 {strides = array<i32>} : memref<1x8x128xf32, #tpu.memory_space<vmem>>, vector<1x8x128xf32>,
    return
  }
  func.func @transform_0(%arg0: i32) -> (i32, i32) {
    %c0_i32 = arith.constant 0 : i32
    %c0_i32_0 = arith.constant 0 : i32
    return %arg0, %c0_i32 : i32, i32
  }
  func.func @transform_1(%arg0: i32) -> (i32, i32) {
    %c0_i32 = arith.constant 0 : i32
    %c0_i32_0 = arith.constant 0 : i32
    return %arg0, %c0_i32 : i32, i32
  }
  func.func @transform_2(%arg0: i32) -> (i32, i32, i32) {
    %c0_i32 = arith.constant 0 : i32
    %c0_i32_0 = arith.constant 0 : i32
    %c0_i32_1 = arith.constant 0 : i32
    return %arg0, %c0_i32, %c0_i32_0 : i32, i32, i32
  }
}

</mosaic_0001>

<llo_original>
// kernel: tpu_custom_call.1
$region0: #{tpu_custom_call.1}
  #allocation0 [shape = 'u32[]', space=smem, size = 0x4, offset = 0x4, fixed_abs, tag = 'smem constant byte address 0x4 - core index']
  #allocation1 [shape = 'u32[144,128]{1,0:T(1,128)}', space=vmem, size = 0x12000, scoped, tag = 'internal scratch']
  %s0 = inlined_call_operand.vmem [shape: f32[16,8], index: 0, kind: input, shape index: {}]
  %s1 = inlined_call_operand.vmem [shape: f32[16,1], index: 1, kind: input, shape index: {}]
  %s2 = inlined_call_operand.hbm [shape: f32[2,8,128], index: 2, kind: output, shape index: {}]
  %s3 = sld [smem:[#allocation0]]
  $region41: #{tpu_custom_call.1} parent=0
    _
  %s5 = ssub.s32 1, %s3
  %s6 = scalar_select 0, %s5, %s3
  $region1: #{tpu_custom_call.1} parent=0
    #allocation2 [shape = 'u8[8192]{0}', space=vmem, size = 0x2000, scoped, tag = 'output window, operand 0']
    #allocation3 [shape = 's32[2]{0}', space=sflag, size = 0x8, scoped, tag = 'scoped memory for tpu_custom_call.1']
    %7 = vsyncpa [#allocation3], 0
    %s8 = scalar_lea.sflag [#allocation3], 1
    %9 = vsyncpa %s8, 0
    loop: start=0, step=1, limit=4
    $region2: #{tpu_custom_call.1} parent=1 // loop_pre_header
      _
    $region3: #{tpu_custom_call.1} parent=1 // loop_header
      %s11 = sphi 0, %s15
      %p12 = scmp.ge.s32.totalorder %s11, 4
      %s21 = sphi 0, %s23
      %s24 = sphi 0, %s21
      %s25 = sphi 0, %s24
      %s41 = sphi 0, %s25
      %s47 = sphi 0, %s49
      %s50 = sphi 0, %s47
      %s51 = sphi 0, %s50
      %s67 = sphi 0, %s51
      %s73 = sphi 0, %s75
      %s76 = sphi 0, %s73
      %s77 = sphi 0, %s76
      %s93 = sphi 0, %s77
    $region4: #{tpu_custom_call.1} parent=1 // loop_header_branch
      %14 = sbr.rel (%p12) target = $region8
    $region5: #{tpu_custom_call.1} parent=1 // loop_body
      %s16 = ssub.s32 %s11, 1
      %s17 = ssub.s32 %s11, 2
      %s18 = sadd.s32 %s11, 1
      %s19 = ssub.s32 %s11, %s18
      %p20 = scmp.eq.s32.totalorder %s19, 0
      %s22 = sadd.s32 %s21, 1
      %s23 = scalar_select %p20, %s21, %s22
      %p26 = pneg %p20
      %p27 = scmp.eq.s32.totalorder %s11, 1
      %p28 = por %p26, %p27
      %p29 = scmp.ne.s32.totalorder %s21, %s24
      %p30 = scmp.eq.s32.totalorder %s11, 0
      %p31 = por %p29, %p30
      %p32 = scmp.ne.s32.totalorder %s21, %s24
      %p33 = scmp.eq.s32.totalorder %s16, 1
      %p34 = por %p32, %p33
      %p35 = scmp.ne.s32.totalorder %s24, %s25
      %p36 = scmp.eq.s32.totalorder %s16, 0
      %p37 = por %p35, %p36
      %p38 = scmp.ne.s32.totalorder %s24, %s25
      %p39 = scmp.eq.s32.totalorder %s17, 1
      %p40 = por %p38, %p39
      %p42 = scmp.ne.s32.totalorder %s25, %s41
      %p43 = scmp.eq.s32.totalorder %s17, 0
      %p44 = por %p42, %p43
      %s45 = ssub.s32 %s11, %s18
      %p46 = scmp.eq.s32.totalorder %s45, 0
      %s48 = sadd.s32 %s47, 1
      %s49 = scalar_select %p46, %s47, %s48
      %p52 = pneg %p46
      %p53 = scmp.eq.s32.totalorder %s11, 1
      %p54 = por %p52, %p53
      %p55 = scmp.ne.s32.totalorder %s47, %s50
      %p56 = scmp.eq.s32.totalorder %s11, 0
      %p57 = por %p55, %p56
      %p58 = scmp.ne.s32.totalorder %s47, %s50
      %p59 = scmp.eq.s32.totalorder %s16, 1
      %p60 = por %p58, %p59
      %p61 = scmp.ne.s32.totalorder %s50, %s51
      %p62 = scmp.eq.s32.totalorder %s16, 0
      %p63 = por %p61, %p62
      %p64 = scmp.ne.s32.totalorder %s50, %s51
      %p65 = scmp.eq.s32.totalorder %s17, 1
      %p66 = por %p64, %p65
      %p68 = scmp.ne.s32.totalorder %s51, %s67
      %p69 = scmp.eq.s32.totalorder %s17, 0
      %p70 = por %p68, %p69
      %s71 = ssub.s32 %s11, %s18
      %p72 = scmp.eq.s32.totalorder %s71, 0
      %s74 = sadd.s32 %s73, 1
      %s75 = scalar_select %p72, %s73, %s74
      %p78 = pneg %p72
      %p79 = scmp.eq.s32.totalorder %s11, 1
      %p80 = por %p78, %p79
      %p81 = scmp.ne.s32.totalorder %s73, %s76
      %p82 = scmp.eq.s32.totalorder %s11, 0
      %p83 = por %p81, %p82
      %p84 = scmp.ne.s32.totalorder %s73, %s76
      %p85 = scmp.eq.s32.totalorder %s16, 1
      %p86 = por %p84, %p85
      %p87 = scmp.ne.s32.totalorder %s76, %s77
      %p88 = scmp.eq.s32.totalorder %s16, 0
      %p89 = por %p87, %p88
      %p90 = scmp.ne.s32.totalorder %s76, %s77
      %p91 = scmp.eq.s32.totalorder %s17, 1
      %p92 = por %p90, %p91
      %p94 = scmp.ne.s32.totalorder %s77, %s93
      %p95 = scmp.eq.s32.totalorder %s17, 0
      %p96 = por %p94, %p95
      %p97 = scmp.le.s32.totalorder 1, %s11
      %p98 = scmp.lt.s32.totalorder %s11, 3
      %p99 = pnand %p97, %p98
      %p100 = pneg %p99
      // Predicated region
      $region9: #{tpu_custom_call.1} parent=5 // pred_check
        _
      $region10: #{tpu_custom_call.1} parent=5 // pred_check_branch
        %102 = sbr.rel (%p99) target = $region12
      $region11: #{tpu_custom_call.1} parent=5 // pred_region
        %s103 = ssub.s32 %s11, 1
      $region12: #{tpu_custom_call.1} parent=5 // pred_fallthru
        _
      %p104 = scmp.lt.s32.totalorder %s11, 2
      // Predicated region
      $region13: #{tpu_custom_call.1} parent=5 // pred_check
        %p105 = pneg %p104
      $region14: #{tpu_custom_call.1} parent=5 // pred_check_branch
        %107 = sbr.rel (%p105) target = $region16
      $region15: #{tpu_custom_call.1} parent=5 // pred_region
        // Predicated region
        $region17: #{tpu_custom_call.1} parent=15 // pred_check
          %p108 = pneg %p31
        $region18: #{tpu_custom_call.1} parent=15 // pred_check_branch
          %110 = sbr.rel (%p108) target = $region20
        $region19: #{tpu_custom_call.1} parent=15 // pred_region
          %p111 = scmp.lt.s32.totalorder %s11, 1
          %s112 = scalar_select %p111, %s11, 1
          %s113 = smul.addr %s112, 8
          %s114 = scalar_lea.vmem %s0, %s113
        $region20: #{tpu_custom_call.1} parent=15 // pred_fallthru
          _
        // Predicated region
        $region21: #{tpu_custom_call.1} parent=15 // pred_check
          %p115 = pneg %p57
        $region22: #{tpu_custom_call.1} parent=15 // pred_check_branch
          %117 = sbr.rel (%p115) target = $region24
        $region23: #{tpu_custom_call.1} parent=15 // pred_region
          %p118 = scmp.lt.s32.totalorder %s11, 1
          %s119 = scalar_select %p118, %s11, 1
          %s120 = smul.addr %s119, 8
          %s121 = scalar_lea.vmem %s1, %s120
        $region24: #{tpu_custom_call.1} parent=15 // pred_fallthru
          _
      $region16: #{tpu_custom_call.1} parent=5 // pred_fallthru
        _
      %p122 = scmp.le.s32.totalorder 1, %s11
      %p123 = scmp.lt.s32.totalorder %s11, 3
      %p124 = pnand %p122, %p123
      %p125 = pneg %p124
      // Predicated region
      $region25: #{tpu_custom_call.1} parent=5 // pred_check
        _
      $region26: #{tpu_custom_call.1} parent=5 // pred_check_branch
        %127 = sbr.rel (%p124) target = $region28
      $region27: #{tpu_custom_call.1} parent=5 // pred_region
        %s128 = ssub.s32 %s11, 1
        %p129 = scmp.lt.s32.totalorder %s16, 1
        %s130 = scalar_select %p129, %s16, 1
        %s131 = smul.addr %s130, 8
        %s132 = scalar_lea.vmem %s0, %s131
        %p133 = pneg %p37
        %p134 = pneg %p34
        %p135 = scmp.lt.s32.totalorder %s16, 1
        %s136 = scalar_select %p135, %s16, 1
        %s137 = smul.addr %s136, 8
        %s138 = scalar_lea.vmem %s1, %s137
        %p139 = pneg %p63
        %p140 = pneg %p60
        %p141 = pneg %p89
        %p142 = pneg %p86
        %s143 = sand.u32 %s76, 1
        %s144 = scalar_lea.sflag [#allocation3], %s143
        %s145 = sand.u32 %s76, 1
        %s146 = smul.addr %s145, 8
        %s147 = scalar_lea.vmem [#allocation2], %s146
        %p148 = scmp.lt.s32.totalorder %s16, 1
        %s149 = scalar_select %p148, %s16, 1
        %s150 = smul.addr %s149, 8
        %s151 = scalar_lea.vmem %s0, %s150
        %p152 = scmp.lt.s32.totalorder %s16, 1
        %s153 = scalar_select %p152, %s16, 1
        %s154 = smul.addr %s153, 8
        %s155 = scalar_lea.vmem %s1, %s154
        %v156 = vld [vmem:[%s151] sm:$0xff]
        %v157 = vld [vmem:[%s155] sm:$0xff]
        %vm158 = vcmask 64512
        %v159 = vsel %vm158, %v156, -inf
        %160 = vmax.xlane.f32.xlu0 %v159
        %v161 = vpop.xlane.xlu0 %160
        %v162 = vsub.f32 %v156, %v161
        %v163 = vmul.f32 %v162, 1.442695
        %v164 = vpow.pop %v163
        %v165 = vsel %vm158, %v164, 0.0
        %166 = vadd.xlane.f32.xlu0 %v165
        %v167 = vpop.xlane.xlu0 %166
        %v168 = vlog2.pop %v167
        %v169 = vmul.f32 %v168, 0.6931472
        %v170 = vadd.f32 %v161, %v169
        %v171 = vsub.f32 %v170, %v157
        %v172 = vmax.f32 %v171, 0.0
        %v173 = vsub.f32 0.0, %v172
        %v174 = vmul.f32 %v173, 1.442695
        %v175 = vpow.pop %v174
        %v176 = vsub.f32 1.0, %v175
        %v177 = vmul.f32 %v176, %v176
        %v178 = vmul.f32 %v177, %v172
        %s179 = smul.u32 %s16, 8
        %v180 = vlaneseq
        %v181 = vshrl.u32 %v180, 7
        %v182 = vstv %s179
        %v183 = vadd.s32 %v182, %v181
        %vm184 = vcmp.lt.s32.totalorder %v183, 16
        %v185 = vsel %vm184, %v178, 0.0
        %vm186 = vcmask 7168
        %v187 = vsel %vm186, %v185, 0.0
        %188 = vadd.xlane.f32.xlu0 %v187
        %v189 = vpop.xlane.xlu0 %188
        %v190 = vrot.slane %v189, 4
        %v191 = vadd.f32 %v189, %v190
        %v192 = vrot.slane %v191, 2
        %v193 = vadd.f32 %v191, %v192
        %v194 = vrot.slane %v193, 1
        %v195 = vadd.f32 %v193, %v194
        %s196 = vtos %v195
        %v197 = vstv %s196
        %198 = vst [vmem:[%s147] sm:$0xff] %v197
        %s199 = sand.u32 %s76, 1
        %s200 = scalar_lea.sflag [#allocation3], %s199
        %s201 = sand.u32 %s76, 1
        %s202 = smul.addr %s201, 8
        %s203 = scalar_lea.vmem [#allocation2], %s202
        // Predicated region
        $region29: #{tpu_custom_call.1} parent=27 // pred_check
          %p204 = pneg %p86
        $region30: #{tpu_custom_call.1} parent=27 // pred_check_branch
          %206 = sbr.rel (%p204) target = $region32
        $region31: #{tpu_custom_call.1} parent=27 // pred_region
          %s208 = ssub.s32 128, 128
          %209 = vsyncadd %s200, %s208
          %s210 = smul.addr %s16, 128
          %s211 = scalar_lea.hbm %s2, %s210
          %s213 = sshll.u32 %s203, 4
          %s214 = int_to_ptr.vmem [resolvable:$true] %s213
          %216 = dma.vmem_to_hbm [thread:$0]  %s214, 128, %s211, %s200
        $region32: #{tpu_custom_call.1} parent=27 // pred_fallthru
          _
      $region28: #{tpu_custom_call.1} parent=5 // pred_fallthru
        _
      %p217 = scmp.le.s32.totalorder 2, %s11
      // Predicated region
      $region33: #{tpu_custom_call.1} parent=5 // pred_check
        %p218 = pneg %p217
      $region34: #{tpu_custom_call.1} parent=5 // pred_check_branch
        %220 = sbr.rel (%p218) target = $region36
      $region35: #{tpu_custom_call.1} parent=5 // pred_region
        %s221 = ssub.s32 %s11, 2
        // Predicated region
        $region37: #{tpu_custom_call.1} parent=35 // pred_check
          %p222 = pneg %p92
        $region38: #{tpu_custom_call.1} parent=35 // pred_check_branch
          %224 = sbr.rel (%p222) target = $region40
        $region39: #{tpu_custom_call.1} parent=35 // pred_region
          %s225 = sand.u32 %s77, 1
          %s226 = scalar_lea.sflag [#allocation3], %s225
          %s227 = sand.u32 %s77, 1
          %s228 = smul.addr %s227, 8
          %s229 = scalar_lea.vmem [#allocation2], %s228
          %230 = dma.done %s226, 128
        $region40: #{tpu_custom_call.1} parent=35 // pred_fallthru
          _
      $region36: #{tpu_custom_call.1} parent=5 // pred_fallthru
        _
    $region6: #{tpu_custom_call.1} parent=1 // loop_footer
      %s15 = sadd.s32 1, %s11
    $region7: #{tpu_custom_call.1} parent=1 // loop_footer_branch
      %10 = sbr.rel target = $region3
    $region8: #{tpu_custom_call.1} parent=1 // loop_exit
      _
    %231 = vsyncpa [#allocation3], 1
    %s232 = scalar_lea.sflag [#allocation3], 1
    %233 = vsyncpa %s232, 1

</llo_original>
